<compile_context>
chip_gen: v7x
topology: tpu7x:2x2x1
jax: 0.10.0
libtpu: 0.0.40
codegen_flags: <defaults>
</compile_context>

<pallas_src>
import functools

import jax
import jax.numpy as jnp
from jax.experimental import pallas as pl
from jax.experimental.pallas import tpu as pltpu


def _expand_rf_kernel(stack_ref, wdh_ref, bdh_ref, wdw_ref, bdw_ref,
                      wh_ref, bh_ref, out_ref):
    # stack_ref / out_ref : (3, C, TN)  -- plane, channels on sublanes, spatial on lanes
    # wdh/wdw/wh          : (C, C)      -- 1x1x1 conv weights, (C_out, C_in)
    # bdh/bdw/bh          : (C, 1)      -- biases, broadcast along lanes
    d = stack_ref[0]
    h = stack_ref[1]
    w = stack_ref[2]

    # kernel_size=1 Conv3d == per-voxel channel matmul: (C_out, C_in) @ (C_in, TN)
    dch = jnp.dot(wdh_ref[...], d, preferred_element_type=jnp.float32) + bdh_ref[...]
    dcw = jnp.dot(wdw_ref[...], d, preferred_element_type=jnp.float32) + bdw_ref[...]
    hc = jnp.dot(wh_ref[...], h, preferred_element_type=jnp.float32) + bh_ref[...]

    out_ref[0] = d                                       # depth passthrough (replaces wrapper stack)
    out_ref[1] = (h + dch).astype(out_ref.dtype)         # height + depth_conv_height
    out_ref[2] = (w + hc + dcw).astype(out_ref.dtype)    # width + height_conv(height) + depth_conv_width


def _choose_tile_spatial(s, c, dtype_bytes, budget_bytes=8 * 1024 * 1024):
    """Largest multiple-of-128 spatial tile whose double-buffered working set
    (3 input planes + 3 output planes) stays under `budget_bytes`."""
    per_col = 6 * 2 * c * dtype_bytes          # 6 blocks x 2 pipeline buffers, per lane column
    tn = budget_bytes // max(per_col, 1)
    if tn >= s:
        return s                               # full extent (always legal)
    tn = max(128, (tn // 128) * 128)
    return min(tn, s)


@functools.partial(jax.jit, static_argnames=("tile_spatial",))
def expand_rf_conv(stack, params, *, tile_spatial=None):
    """JAX/Pallas equivalent of ExpandRFConv.forward.

    stack: (3, B, C, D, H, W)  -> returns (3, B, C, D, H, W)
    params: dict with PyTorch Conv3d layouts
      depth_w  : (2C, C, 1, 1, 1),  depth_b  : (2C,)
      height_w : (C,  C, 1, 1, 1),  height_b : (C,)
    """
    three, b, c, d, h, w = stack.shape
    assert three == 3
    s = d * h * w
    stack_f = stack.reshape(3, b, c, s)            # metadata-only reshape, no transpose

    # Conv3d(k=1) weights already are (C_out, C_in) matrices for the (C, TN) orientation.
    w_d = params["depth_w"][:, :, 0, 0, 0]         # (2C, C)
    wdh, wdw = w_d[:c], w_d[c:]                    # host-side split: no in-vreg lane slice
    bdh = params["depth_b"][:c].reshape(c, 1)
    bdw = params["depth_b"][c:].reshape(c, 1)
    wh = params["height_w"][:, :, 0, 0, 0]         # (C, C)
    bh = params["height_b"].reshape(c, 1)

    dtype_bytes = jnp.dtype(stack.dtype).itemsize
    tn = tile_spatial if tile_spatial is not None else _choose_tile_spatial(s, c, dtype_bytes)
    grid = (b, pl.cdiv(s, tn))                     # no jnp.pad: ragged last block is masked by Pallas

    slab_spec = pl.BlockSpec((3, None, c, tn), lambda bi, j: (0, bi, 0, j))
    w_spec = pl.BlockSpec((c, c), lambda bi, j: (0, 0))
    b_spec = pl.BlockSpec((c, 1), lambda bi, j: (0, 0))

    out_f = pl.pallas_call(
        _expand_rf_kernel,
        out_shape=jax.ShapeDtypeStruct((3, b, c, s), stack.dtype),
        grid_spec=pltpu.PrefetchScalarGridSpec(
            num_scalar_prefetch=0,
            grid=grid,
            in_specs=[slab_spec, w_spec, b_spec, w_spec, b_spec, w_spec, b_spec],
            out_specs=slab_spec,
        ),
        compiler_params=pltpu.CompilerParams(
            dimension_semantics=("parallel", "parallel"),
            vmem_limit_bytes=48 * 1024 * 1024),
    )(stack_f, wdh, bdh, wdw, bdw, wh, bh)

    return out_f.reshape(3, b, c, d, h, w)


def _reference(stack, params):
    """Pure-JAX reference mirroring the PyTorch forward (for verification)."""
    depth, height, width = stack[0], stack[1], stack[2]
    c = depth.shape[1]
    wd = params["depth_w"][:, :, 0, 0, 0]   # (2C, C)
    bd = params["depth_b"]
    wh = params["height_w"][:, :, 0, 0, 0]  # (C, C)
    bh = params["height_b"]
    dc = jnp.einsum("oc,bcdhw->bodhw", wd, depth) + bd[None, :, None, None, None]
    dch, dcw = dc[:, :c], dc[:, c:]
    hc = jnp.einsum("oc,bcdhw->bodhw", wh, height) + bh[None, :, None, None, None]
    w_out = width + hc + dcw
    h_out = height + dch
    return jnp.stack([depth, h_out, w_out], axis=0)


if __name__ == "__main__":
    key = jax.random.PRNGKey(0)
    B, C, D, H, W = 2, 4, 4, 8, 8

    k_d, k_h, k_w, k_wd, k_bd, k_wh, k_bh = jax.random.split(key, 7)
    depth = jax.random.normal(k_d, (B, C, D, H, W), dtype=jnp.float32)
    height = jax.random.normal(k_h, (B, C, D, H, W), dtype=jnp.float32)
    width = jax.random.normal(k_w, (B, C, D, H, W), dtype=jnp.float32)
    stack = jnp.stack([depth, height, width], axis=0)   # (3, B, C, D, H, W)

    # Deterministic synthetic parameters (PyTorch Conv3d weight/bias shapes).
    bound_d = 1.0 / (C ** 0.5)
    params = {
        "depth_w": jax.random.uniform(k_wd, (2 * C, C, 1, 1, 1),
                                      minval=-bound_d, maxval=bound_d,
                                      dtype=jnp.float32),
        "depth_b": jax.random.uniform(k_bd, (2 * C,),
                                      minval=-bound_d, maxval=bound_d,
                                      dtype=jnp.float32),
        "height_w": jax.random.uniform(k_wh, (C, C, 1, 1, 1),
                                       minval=-bound_d, maxval=bound_d,
                                       dtype=jnp.float32),
        "height_b": jax.random.uniform(k_bh, (C,),
                                       minval=-bound_d, maxval=bound_d,
                                       dtype=jnp.float32),
    }

    out = jax.block_until_ready(expand_rf_conv(stack, params))
    ref = jax.block_until_ready(_reference(stack, params))

    assert out.shape == (3, B, C, D, H, W), out.shape
    assert jnp.allclose(out, ref, atol=1e-5, rtol=1e-5), "mismatch vs reference"
    print("KERNEL_OK")
</pallas_src>

<mosaic_0001>
module attributes {stable_mosaic.version = 11 : i64} {
  func.func @_expand_rf_kernel(%arg0: i32, %arg1: i32, %arg2: memref<3x1x4x256xf32, #tpu.memory_space<vmem>>, %arg3: memref<4x4xf32, #tpu.memory_space<vmem>>, %arg4: memref<4x1xf32, #tpu.memory_space<vmem>>, %arg5: memref<4x4xf32, #tpu.memory_space<vmem>>, %arg6: memref<4x1xf32, #tpu.memory_space<vmem>>, %arg7: memref<4x4xf32, #tpu.memory_space<vmem>>, %arg8: memref<4x1xf32, #tpu.memory_space<vmem>>, %arg9: memref<3x1x4x256xf32, #tpu.memory_space<vmem>>) attributes {dimension_semantics = [#tpu.dimension_semantics<parallel>, #tpu.dimension_semantics<parallel>], iteration_bounds = array<i64: 2, 1>, scalar_prefetch = 0 : i64, scratch_operands = 0 : i64, tpu.core_type = #tpu.core_type<tc>, window_params = [{transform_indices = @transform_0, window_bounds = array<i64: 3, 1, 4, 256>}, {pipeline_mode = #tpu.pipeline_mode<synchronous>, transform_indices = @transform_1, window_bounds = array<i64: 4, 4>}, {pipeline_mode = #tpu.pipeline_mode<synchronous>, transform_indices = @transform_2, window_bounds = array<i64: 4, 1>}, {pipeline_mode = #tpu.pipeline_mode<synchronous>, transform_indices = @transform_3, window_bounds = array<i64: 4, 4>}, {pipeline_mode = #tpu.pipeline_mode<synchronous>, transform_indices = @transform_4, window_bounds = array<i64: 4, 1>}, {pipeline_mode = #tpu.pipeline_mode<synchronous>, transform_indices = @transform_5, window_bounds = array<i64: 4, 4>}, {pipeline_mode = #tpu.pipeline_mode<synchronous>, transform_indices = @transform_6, window_bounds = array<i64: 4, 1>}, {transform_indices = @transform_7, window_bounds = array<i64: 3, 1, 4, 256>}]} {
    %c0 = arith.constant 0 : index
    %c0_0 = arith.constant 0 : index
    %c0_1 = arith.constant 0 : index
    %c0_2 = arith.constant 0 : index
    %0 = vector.load %arg2[%c0, %c0_0, %c0_1, %c0_2] : memref<3x1x4x256xf32, #tpu.memory_space<vmem>>, vector<1x1x4x256xf32>
    %1 = vector.shape_cast %0 : vector<1x1x4x256xf32> to vector<4x256xf32>
    %c1 = arith.constant 1 : index
    %c0_3 = arith.constant 0 : index
    %c0_4 = arith.constant 0 : index
    %c0_5 = arith.constant 0 : index
    %2 = vector.load %arg2[%c1, %c0_3, %c0_4, %c0_5] : memref<3x1x4x256xf32, #tpu.memory_space<vmem>>, vector<1x1x4x256xf32>
    %3 = vector.shape_cast %2 : vector<1x1x4x256xf32> to vector<4x256xf32>
    %c2 = arith.constant 2 : index
    %c0_6 = arith.constant 0 : index
    %c0_7 = arith.constant 0 : index
    %c0_8 = arith.constant 0 : index
    %4 = vector.load %arg2[%c2, %c0_6, %c0_7, %c0_8] : memref<3x1x4x256xf32, #tpu.memory_space<vmem>>, vector<1x1x4x256xf32>
    %5 = vector.shape_cast %4 : vector<1x1x4x256xf32> to vector<4x256xf32>
    %c0_9 = arith.constant 0 : index
    %c0_10 = arith.constant 0 : index
    %6 = vector.load %arg3[%c0_9, %c0_10] : memref<4x4xf32, #tpu.memory_space<vmem>>, vector<4x4xf32>
    %cst = arith.constant dense<0.000000e+00> : vector<4x256xf32>
    %7 = tpu.matmul %6, %1, %cst {dimension_numbers = #tpu.dot_dimension_numbers<[1], [0], [0], [1], [0, 0, 1, 1], [], []>} : vector<4x4xf32>, vector<4x256xf32>, vector<4x256xf32> -> vector<4x256xf32>
    %c0_11 = arith.constant 0 : index
    %c0_12 = arith.constant 0 : index
    %8 = vector.load %arg4[%c0_11, %c0_12] : memref<4x1xf32, #tpu.memory_space<vmem>>, vector<4x1xf32>
    %9 = vector.broadcast %8 : vector<4x1xf32> to vector<4x256xf32>
    %10 = arith.addf %7, %9 : vector<4x256xf32>
    %c0_13 = arith.constant 0 : index
    %c0_14 = arith.constant 0 : index
    %11 = vector.load %arg5[%c0_13, %c0_14] : memref<4x4xf32, #tpu.memory_space<vmem>>, vector<4x4xf32>
    %cst_15 = arith.constant dense<0.000000e+00> : vector<4x256xf32>
    %12 = tpu.matmul %11, %1, %cst_15 {dimension_numbers = #tpu.dot_dimension_numbers<[1], [0], [0], [1], [0, 0, 1, 1], [], []>} : vector<4x4xf32>, vector<4x256xf32>, vector<4x256xf32> -> vector<4x256xf32>
    %c0_16 = arith.constant 0 : index
    %c0_17 = arith.constant 0 : index
    %13 = vector.load %arg6[%c0_16, %c0_17] : memref<4x1xf32, #tpu.memory_space<vmem>>, vector<4x1xf32>
    %14 = vector.broadcast %13 : vector<4x1xf32> to vector<4x256xf32>
    %15 = arith.addf %12, %14 : vector<4x256xf32>
    %c0_18 = arith.constant 0 : index
    %c0_19 = arith.constant 0 : index
    %16 = vector.load %arg7[%c0_18, %c0_19] : memref<4x4xf32, #tpu.memory_space<vmem>>, vector<4x4xf32>
    %cst_20 = arith.constant dense<0.000000e+00> : vector<4x256xf32>
    %17 = tpu.matmul %16, %3, %cst_20 {dimension_numbers = #tpu.dot_dimension_numbers<[1], [0], [0], [1], [0, 0, 1, 1], [], []>} : vector<4x4xf32>, vector<4x256xf32>, vector<4x256xf32> -> vector<4x256xf32>
    %c0_21 = arith.constant 0 : index
    %c0_22 = arith.constant 0 : index
    %18 = vector.load %arg8[%c0_21, %c0_22] : memref<4x1xf32, #tpu.memory_space<vmem>>, vector<4x1xf32>
    %19 = vector.broadcast %18 : vector<4x1xf32> to vector<4x256xf32>
    %20 = arith.addf %17, %19 : vector<4x256xf32>
    %c0_23 = arith.constant 0 : index
    %c0_24 = arith.constant 0 : index
    %c0_25 = arith.constant 0 : index
    %c0_26 = arith.constant 0 : index
    %21 = vector.load %arg9[%c0_23, %c0_24, %c0_25, %c0_26] : memref<3x1x4x256xf32, #tpu.memory_space<vmem>>, vector<1x1x4x256xf32>
    %22 = vector.shape_cast %21 : vector<1x1x4x256xf32> to vector<4x256xf32>
    %23 = vector.shape_cast %1 : vector<4x256xf32> to vector<1x1x4x256xf32>
    tpu.vector_store %arg9[%c0_23, %c0_24, %c0_25, %c0_26], %23 {strides = array<i32>} : memref<3x1x4x256xf32, #tpu.memory_space<vmem>>, vector<1x1x4x256xf32>,
    %24 = arith.addf %3, %10 : vector<4x256xf32>
    %c1_27 = arith.constant 1 : index
    %c0_28 = arith.constant 0 : index
    %c0_29 = arith.constant 0 : index
    %c0_30 = arith.constant 0 : index
    %25 = vector.load %arg9[%c1_27, %c0_28, %c0_29, %c0_30] : memref<3x1x4x256xf32, #tpu.memory_space<vmem>>, vector<1x1x4x256xf32>
    %26 = vector.shape_cast %25 : vector<1x1x4x256xf32> to vector<4x256xf32>
    %27 = vector.shape_cast %24 : vector<4x256xf32> to vector<1x1x4x256xf32>
    tpu.vector_store %arg9[%c1_27, %c0_28, %c0_29, %c0_30], %27 {strides = array<i32>} : memref<3x1x4x256xf32, #tpu.memory_space<vmem>>, vector<1x1x4x256xf32>,
    %28 = arith.addf %5, %20 : vector<4x256xf32>
    %29 = arith.addf %28, %15 : vector<4x256xf32>
    %c2_31 = arith.constant 2 : index
    %c0_32 = arith.constant 0 : index
    %c0_33 = arith.constant 0 : index
    %c0_34 = arith.constant 0 : index
    %30 = vector.load %arg9[%c2_31, %c0_32, %c0_33, %c0_34] : memref<3x1x4x256xf32, #tpu.memory_space<vmem>>, vector<1x1x4x256xf32>
    %31 = vector.shape_cast %30 : vector<1x1x4x256xf32> to vector<4x256xf32>
    %32 = vector.shape_cast %29 : vector<4x256xf32> to vector<1x1x4x256xf32>
    tpu.vector_store %arg9[%c2_31, %c0_32, %c0_33, %c0_34], %32 {strides = array<i32>} : memref<3x1x4x256xf32, #tpu.memory_space<vmem>>, vector<1x1x4x256xf32>,
    return
  }
  func.func @transform_0(%arg0: i32, %arg1: i32) -> (i32, i32, i32, i32) {
    %c0_i32 = arith.constant 0 : i32
    %c0_i32_0 = arith.constant 0 : i32
    %c0_i32_1 = arith.constant 0 : i32
    return %c0_i32, %arg0, %c0_i32_0, %arg1 : i32, i32, i32, i32
  }
  func.func @transform_1(%arg0: i32, %arg1: i32) -> (i32, i32) {
    %c0_i32 = arith.constant 0 : i32
    %c0_i32_0 = arith.constant 0 : i32
    %c0_i32_1 = arith.constant 0 : i32
    return %c0_i32, %c0_i32_0 : i32, i32
  }
  func.func @transform_2(%arg0: i32, %arg1: i32) -> (i32, i32) {
    %c0_i32 = arith.constant 0 : i32
    %c0_i32_0 = arith.constant 0 : i32
    %c0_i32_1 = arith.constant 0 : i32
    return %c0_i32, %c0_i32_0 : i32, i32
  }
  func.func @transform_3(%arg0: i32, %arg1: i32) -> (i32, i32) {
    %c0_i32 = arith.constant 0 : i32
    %c0_i32_0 = arith.constant 0 : i32
    %c0_i32_1 = arith.constant 0 : i32
    return %c0_i32, %c0_i32_0 : i32, i32
  }
  func.func @transform_4(%arg0: i32, %arg1: i32) -> (i32, i32) {
    %c0_i32 = arith.constant 0 : i32
    %c0_i32_0 = arith.constant 0 : i32
    %c0_i32_1 = arith.constant 0 : i32
    return %c0_i32, %c0_i32_0 : i32, i32
  }
  func.func @transform_5(%arg0: i32, %arg1: i32) -> (i32, i32) {
    %c0_i32 = arith.constant 0 : i32
    %c0_i32_0 = arith.constant 0 : i32
    %c0_i32_1 = arith.constant 0 : i32
    return %c0_i32, %c0_i32_0 : i32, i32
  }
  func.func @transform_6(%arg0: i32, %arg1: i32) -> (i32, i32) {
    %c0_i32 = arith.constant 0 : i32
    %c0_i32_0 = arith.constant 0 : i32
    %c0_i32_1 = arith.constant 0 : i32
    return %c0_i32, %c0_i32_0 : i32, i32
  }
  func.func @transform_7(%arg0: i32, %arg1: i32) -> (i32, i32, i32, i32) {
    %c0_i32 = arith.constant 0 : i32
    %c0_i32_0 = arith.constant 0 : i32
    %c0_i32_1 = arith.constant 0 : i32
    return %c0_i32, %arg0, %c0_i32_0, %arg1 : i32, i32, i32, i32
  }
}

</mosaic_0001>

<llo_original>
// kernel: expand_rf_conv.1
$region0: #{expand_rf_conv.1}
  #allocation0 [shape = 'u32[]', space=smem, size = 0x4, offset = 0x4, fixed_abs, tag = 'smem constant byte address 0x4 - core index']
  #allocation1 [shape = 'u32[144,128]{1,0:T(1,128)}', space=vmem, size = 0x12000, scoped, tag = 'internal scratch']
  %s0 = inlined_call_operand.vmem [shape: f32[3,2,4,256], index: 0, kind: input, shape index: {}]
  %s1 = inlined_call_operand.vmem [shape: f32[4,4], index: 1, kind: input, shape index: {}]
  %s2 = inlined_call_operand.vmem [shape: f32[4,1], index: 2, kind: input, shape index: {}]
  %s3 = inlined_call_operand.vmem [shape: f32[4,4], index: 3, kind: input, shape index: {}]
  %s4 = inlined_call_operand.vmem [shape: f32[4,1], index: 4, kind: input, shape index: {}]
  %s5 = inlined_call_operand.vmem [shape: f32[4,4], index: 5, kind: input, shape index: {}]
  %s6 = inlined_call_operand.vmem [shape: f32[4,1], index: 6, kind: input, shape index: {}]
  %s7 = inlined_call_operand.vmem [shape: f32[3,2,4,256], index: 7, kind: output, shape index: {}]
  %s8 = sld [smem:[#allocation0]]
  $region133: #{expand_rf_conv.1} parent=0
    _
  %s10 = ssub.s32 1, %s8
  %s11 = scalar_select 0, %s10, %s8
  $region1: #{expand_rf_conv.1} parent=0
    #allocation2 [shape = 'u8[24576]{0}', space=vmem, size = 0x6000, scoped, tag = 'input window, operand 0']
    #allocation3 [shape = 'u8[24576]{0}', space=vmem, size = 0x6000, scoped, tag = 'output window, operand 0']
    loop: start=0, step=1, limit=4
    $region2: #{expand_rf_conv.1} parent=1 // loop_pre_header
      _
    $region3: #{expand_rf_conv.1} parent=1 // loop_header
      %s13 = sphi 0, %s17
      %p14 = scmp.ge.s32.totalorder %s13, 4
      %s20 = sphi 0, %s32
      %s21 = sphi 0, %s28
      %s22 = sphi 0, %s20
      %s23 = sphi 0, %s21
      %s24 = sphi 0, %s22
      %s25 = sphi 0, %s23
      %s37 = sphi 0, %s39
      %s40 = sphi 0, %s37
      %s41 = sphi 0, %s40
      %s57 = sphi 0, %s41
      %s61 = sphi 0, %s61
      %s63 = sphi 0, %s61
      %s64 = sphi 0, %s63
      %s78 = sphi 0, %s64
      %s82 = sphi 0, %s82
      %s84 = sphi 0, %s82
      %s85 = sphi 0, %s84
      %s99 = sphi 0, %s85
      %s103 = sphi 0, %s103
      %s105 = sphi 0, %s103
      %s106 = sphi 0, %s105
      %s120 = sphi 0, %s106
      %s124 = sphi 0, %s124
      %s126 = sphi 0, %s124
      %s127 = sphi 0, %s126
      %s141 = sphi 0, %s127
      %s145 = sphi 0, %s145
      %s147 = sphi 0, %s145
      %s148 = sphi 0, %s147
      %s162 = sphi 0, %s148
      %s166 = sphi 0, %s166
      %s168 = sphi 0, %s166
      %s169 = sphi 0, %s168
      %s183 = sphi 0, %s169
      %s191 = sphi 0, %s193
      %s194 = sphi 0, %s191
      %s195 = sphi 0, %s194
      %s211 = sphi 0, %s195
    $region4: #{expand_rf_conv.1} parent=1 // loop_header_branch
      %16 = sbr.rel (%p14) target = $region8
    $region5: #{expand_rf_conv.1} parent=1 // loop_body
      %s18 = ssub.s32 %s13, 1
      %s19 = ssub.s32 %s13, 2
      %s26 = sadd.s32 1, %s21
      %p27 = scmp.ge.s32.totalorder %s26, 1
      %s28 = scalar_select %p27, 0, %s26
      %s29 = sadd.s32 1, %s20
      %s30 = scalar_select %p27, %s29, %s20
      %p31 = scmp.ge.s32.totalorder %s30, 2
      %s32 = scalar_select %p31, 0, %s30
      %s33 = ssub.s32 %s20, %s32
      %s34 = ssub.s32 %s21, %s28
      %s35 = sor.u32 %s33, %s34
      %p36 = scmp.eq.s32.totalorder %s35, 0
      %s38 = sadd.s32 %s37, 1
      %s39 = scalar_select %p36, %s37, %s38
      %p42 = pneg %p36
      %p43 = scmp.eq.s32.totalorder %s13, 1
      %p44 = por %p42, %p43
      %p45 = scmp.ne.s32.totalorder %s37, %s40
      %p46 = scmp.eq.s32.totalorder %s13, 0
      %p47 = por %p45, %p46
      %p48 = scmp.ne.s32.totalorder %s37, %s40
      %p49 = scmp.eq.s32.totalorder %s18, 1
      %p50 = por %p48, %p49
      %p51 = scmp.ne.s32.totalorder %s40, %s41
      %p52 = scmp.eq.s32.totalorder %s18, 0
      %p53 = por %p51, %p52
      %p54 = scmp.ne.s32.totalorder %s40, %s41
      %p55 = scmp.eq.s32.totalorder %s19, 1
      %p56 = por %p54, %p55
      %p58 = scmp.ne.s32.totalorder %s41, %s57
      %p59 = scmp.eq.s32.totalorder %s19, 0
      %p60 = por %p58, %p59
      %s62 = sadd.s32 %s61, 1
      %p65 = scmp.eq.s32.totalorder %s13, 1
      %p66 = scmp.ne.s32.totalorder %s61, %s63
      %p67 = scmp.eq.s32.totalorder %s13, 0
      %p68 = por %p66, %p67
      %p69 = scmp.ne.s32.totalorder %s61, %s63
      %p70 = scmp.eq.s32.totalorder %s18, 1
      %p71 = por %p69, %p70
      %p72 = scmp.ne.s32.totalorder %s63, %s64
      %p73 = scmp.eq.s32.totalorder %s18, 0
      %p74 = por %p72, %p73
      %p75 = scmp.ne.s32.totalorder %s63, %s64
      %p76 = scmp.eq.s32.totalorder %s19, 1
      %p77 = por %p75, %p76
      %p79 = scmp.ne.s32.totalorder %s64, %s78
      %p80 = scmp.eq.s32.totalorder %s19, 0
      %p81 = por %p79, %p80
      %s83 = sadd.s32 %s82, 1
      %p86 = scmp.eq.s32.totalorder %s13, 1
      %p87 = scmp.ne.s32.totalorder %s82, %s84
      %p88 = scmp.eq.s32.totalorder %s13, 0
      %p89 = por %p87, %p88
      %p90 = scmp.ne.s32.totalorder %s82, %s84
      %p91 = scmp.eq.s32.totalorder %s18, 1
      %p92 = por %p90, %p91
      %p93 = scmp.ne.s32.totalorder %s84, %s85
      %p94 = scmp.eq.s32.totalorder %s18, 0
      %p95 = por %p93, %p94
      %p96 = scmp.ne.s32.totalorder %s84, %s85
      %p97 = scmp.eq.s32.totalorder %s19, 1
      %p98 = por %p96, %p97
      %p100 = scmp.ne.s32.totalorder %s85, %s99
      %p101 = scmp.eq.s32.totalorder %s19, 0
      %p102 = por %p100, %p101
      %s104 = sadd.s32 %s103, 1
      %p107 = scmp.eq.s32.totalorder %s13, 1
      %p108 = scmp.ne.s32.totalorder %s103, %s105
      %p109 = scmp.eq.s32.totalorder %s13, 0
      %p110 = por %p108, %p109
      %p111 = scmp.ne.s32.totalorder %s103, %s105
      %p112 = scmp.eq.s32.totalorder %s18, 1
      %p113 = por %p111, %p112
      %p114 = scmp.ne.s32.totalorder %s105, %s106
      %p115 = scmp.eq.s32.totalorder %s18, 0
      %p116 = por %p114, %p115
      %p117 = scmp.ne.s32.totalorder %s105, %s106
      %p118 = scmp.eq.s32.totalorder %s19, 1
      %p119 = por %p117, %p118
      %p121 = scmp.ne.s32.totalorder %s106, %s120
      %p122 = scmp.eq.s32.totalorder %s19, 0
      %p123 = por %p121, %p122
      %s125 = sadd.s32 %s124, 1
      %p128 = scmp.eq.s32.totalorder %s13, 1
      %p129 = scmp.ne.s32.totalorder %s124, %s126
      %p130 = scmp.eq.s32.totalorder %s13, 0
      %p131 = por %p129, %p130
      %p132 = scmp.ne.s32.totalorder %s124, %s126
      %p133 = scmp.eq.s32.totalorder %s18, 1
      %p134 = por %p132, %p133
      %p135 = scmp.ne.s32.totalorder %s126, %s127
      %p136 = scmp.eq.s32.totalorder %s18, 0
      %p137 = por %p135, %p136
      %p138 = scmp.ne.s32.totalorder %s126, %s127
      %p139 = scmp.eq.s32.totalorder %s19, 1
      %p140 = por %p138, %p139
      %p142 = scmp.ne.s32.totalorder %s127, %s141
      %p143 = scmp.eq.s32.totalorder %s19, 0
      %p144 = por %p142, %p143
      %s146 = sadd.s32 %s145, 1
      %p149 = scmp.eq.s32.totalorder %s13, 1
      %p150 = scmp.ne.s32.totalorder %s145, %s147
      %p151 = scmp.eq.s32.totalorder %s13, 0
      %p152 = por %p150, %p151
      %p153 = scmp.ne.s32.totalorder %s145, %s147
      %p154 = scmp.eq.s32.totalorder %s18, 1
      %p155 = por %p153, %p154
      %p156 = scmp.ne.s32.totalorder %s147, %s148
      %p157 = scmp.eq.s32.totalorder %s18, 0
      %p158 = por %p156, %p157
      %p159 = scmp.ne.s32.totalorder %s147, %s148
      %p160 = scmp.eq.s32.totalorder %s19, 1
      %p161 = por %p159, %p160
      %p163 = scmp.ne.s32.totalorder %s148, %s162
      %p164 = scmp.eq.s32.totalorder %s19, 0
      %p165 = por %p163, %p164
      %s167 = sadd.s32 %s166, 1
      %p170 = scmp.eq.s32.totalorder %s13, 1
      %p171 = scmp.ne.s32.totalorder %s166, %s168
      %p172 = scmp.eq.s32.totalorder %s13, 0
      %p173 = por %p171, %p172
      %p174 = scmp.ne.s32.totalorder %s166, %s168
      %p175 = scmp.eq.s32.totalorder %s18, 1
      %p176 = por %p174, %p175
      %p177 = scmp.ne.s32.totalorder %s168, %s169
      %p178 = scmp.eq.s32.totalorder %s18, 0
      %p179 = por %p177, %p178
      %p180 = scmp.ne.s32.totalorder %s168, %s169
      %p181 = scmp.eq.s32.totalorder %s19, 1
      %p182 = por %p180, %p181
      %p184 = scmp.ne.s32.totalorder %s169, %s183
      %p185 = scmp.eq.s32.totalorder %s19, 0
      %p186 = por %p184, %p185
      %s187 = ssub.s32 %s20, %s32
      %s188 = ssub.s32 %s21, %s28
      %s189 = sor.u32 %s187, %s188
      %p190 = scmp.eq.s32.totalorder %s189, 0
      %s192 = sadd.s32 %s191, 1
      %s193 = scalar_select %p190, %s191, %s192
      %p196 = pneg %p190
      %p197 = scmp.eq.s32.totalorder %s13, 1
      %p198 = por %p196, %p197
      %p199 = scmp.ne.s32.totalorder %s191, %s194
      %p200 = scmp.eq.s32.totalorder %s13, 0
      %p201 = por %p199, %p200
      %p202 = scmp.ne.s32.totalorder %s191, %s194
      %p203 = scmp.eq.s32.totalorder %s18, 1
      %p204 = por %p202, %p203
      %p205 = scmp.ne.s32.totalorder %s194, %s195
      %p206 = scmp.eq.s32.totalorder %s18, 0
      %p207 = por %p205, %p206
      %p208 = scmp.ne.s32.totalorder %s194, %s195
      %p209 = scmp.eq.s32.totalorder %s19, 1
      %p210 = por %p208, %p209
      %p212 = scmp.ne.s32.totalorder %s195, %s211
      %p213 = scmp.eq.s32.totalorder %s19, 0
      %p214 = por %p212, %p213
      %p215 = scmp.le.s32.totalorder 1, %s13
      %p216 = scmp.lt.s32.totalorder %s13, 3
      %p217 = pnand %p215, %p216
      %p218 = pneg %p217
      // Predicated region
      $region9: #{expand_rf_conv.1} parent=5 // pred_check
        _
      $region10: #{expand_rf_conv.1} parent=5 // pred_check_branch
        %220 = sbr.rel (%p217) target = $region12
      $region11: #{expand_rf_conv.1} parent=5 // pred_region
        %s221 = ssub.s32 %s13, 1
        // Predicated region
        $region13: #{expand_rf_conv.1} parent=11 // pred_check
          %p222 = pneg %p74
        $region14: #{expand_rf_conv.1} parent=11 // pred_check_branch
          %224 = sbr.rel (%p222) target = $region16
        $region15: #{expand_rf_conv.1} parent=11 // pred_region
          _
        $region16: #{expand_rf_conv.1} parent=11 // pred_fallthru
          _
        // Predicated region
        $region17: #{expand_rf_conv.1} parent=11 // pred_check
          %p225 = pneg %p95
        $region18: #{expand_rf_conv.1} parent=11 // pred_check_branch
          %227 = sbr.rel (%p225) target = $region20
        $region19: #{expand_rf_conv.1} parent=11 // pred_region
          _
        $region20: #{expand_rf_conv.1} parent=11 // pred_fallthru
          _
        // Predicated region
        $region21: #{expand_rf_conv.1} parent=11 // pred_check
          %p228 = pneg %p116
        $region22: #{expand_rf_conv.1} parent=11 // pred_check_branch
          %230 = sbr.rel (%p228) target = $region24
        $region23: #{expand_rf_conv.1} parent=11 // pred_region
          _
        $region24: #{expand_rf_conv.1} parent=11 // pred_fallthru
          _
        // Predicated region
        $region25: #{expand_rf_conv.1} parent=11 // pred_check
          %p231 = pneg %p137
        $region26: #{expand_rf_conv.1} parent=11 // pred_check_branch
          %233 = sbr.rel (%p231) target = $region28
        $region27: #{expand_rf_conv.1} parent=11 // pred_region
          _
        $region28: #{expand_rf_conv.1} parent=11 // pred_fallthru
          _
        // Predicated region
        $region29: #{expand_rf_conv.1} parent=11 // pred_check
          %p234 = pneg %p158
        $region30: #{expand_rf_conv.1} parent=11 // pred_check_branch
          %236 = sbr.rel (%p234) target = $region32
        $region31: #{expand_rf_conv.1} parent=11 // pred_region
          _
        $region32: #{expand_rf_conv.1} parent=11 // pred_fallthru
          _
        // Predicated region
        $region33: #{expand_rf_conv.1} parent=11 // pred_check
          %p237 = pneg %p179
        $region34: #{expand_rf_conv.1} parent=11 // pred_check_branch
          %239 = sbr.rel (%p237) target = $region36
        $region35: #{expand_rf_conv.1} parent=11 // pred_region
          _
        $region36: #{expand_rf_conv.1} parent=11 // pred_fallthru
          _
      $region12: #{expand_rf_conv.1} parent=5 // pred_fallthru
        _
      %p240 = scmp.lt.s32.totalorder %s13, 2
      // Predicated region
      $region37: #{expand_rf_conv.1} parent=5 // pred_check
        %p241 = pneg %p240
      $region38: #{expand_rf_conv.1} parent=5 // pred_check_branch
        %243 = sbr.rel (%p241) target = $region40
      $region39: #{expand_rf_conv.1} parent=5 // pred_region
        // Predicated region
        $region41: #{expand_rf_conv.1} parent=39 // pred_check
          %p244 = pneg %p47
        $region42: #{expand_rf_conv.1} parent=39 // pred_check_branch
          %246 = sbr.rel (%p244) target = $region44
        $region43: #{expand_rf_conv.1} parent=39 // pred_region
          %s247 = sand.u32 %s37, 1
          %s248 = sand.u32 %s37, 1
          %s249 = smul.addr %s248, 24
          %s250 = scalar_lea.vmem [#allocation2], %s249
          %s251 = smul.u32 2, %s21
          %s252 = smul.addr %s20, 2
          %s253 = sadd.s32 %s251, %s252
          %s254 = smul.addr %s253, 4
          %s255 = scalar_lea.vmem %s0, %s254
          // Predicated region
          $region45: #{expand_rf_conv.1} parent=43 // pred_check
            _
          $region46: #{expand_rf_conv.1} parent=43 // pred_check_branch
            %257 = sbr.rel (0) target = $region48
          $region47: #{expand_rf_conv.1} parent=43 // pred_region
            // Predicated region
            $region49: #{expand_rf_conv.1} parent=47 // pred_check
              _
            $region50: #{expand_rf_conv.1} parent=47 // pred_check_branch
              %259 = sbr.rel (0) target = $region52
            $region51: #{expand_rf_conv.1} parent=47 // pred_region
              // Predicated region
              $region64: #{expand_rf_conv.1} parent=51 // pred_check
                _
              $region65: #{expand_rf_conv.1} parent=51 // pred_check_branch
                %278 = sbr.rel (0) target = $region67
              $region66: #{expand_rf_conv.1} parent=51 // pred_region
                loop: start=0, step=1, limit=1
                $region68: #{expand_rf_conv.1} parent=66 // loop_pre_header
                  _
                $region69: #{expand_rf_conv.1} parent=66 // loop_header
                  %s280 = sphi 0, %s284
                  %p281 = scmp.ge.s32.totalorder %s280, 1
                  %s285 = sphi %s255, %s255
                  %s286 = sphi %s250, %s250
                $region70: #{expand_rf_conv.1} parent=66 // loop_header_branch
                  %283 = sbr.rel (%p281) target = $region74
                $region71: #{expand_rf_conv.1} parent=66 // loop_body
                  %v287 = vld [vmem:[%s285] sm:$0xff]
                  %288 = vst [vmem:[%s286] sm:$0xff] %v287
                  %v289 = vld [vmem:[%s285 + $0x10] sm:$0xff]
                  %290 = vst [vmem:[%s286 + $0x8] sm:$0xff] %v289
                  %v291 = vld [vmem:[%s285 + $0x20] sm:$0xff]
                  %292 = vst [vmem:[%s286 + $0x10] sm:$0xff] %v291
                $region72: #{expand_rf_conv.1} parent=66 // loop_footer
                  %s284 = sadd.s32 1, %s280
                $region73: #{expand_rf_conv.1} parent=66 // loop_footer_branch
                  %279 = sbr.rel target = $region69
                $region74: #{expand_rf_conv.1} parent=66 // loop_exit
                  _
              $region67: #{expand_rf_conv.1} parent=51 // pred_fallthru
                _
              // Predicated region
              $region75: #{expand_rf_conv.1} parent=51 // pred_check
                _
              $region76: #{expand_rf_conv.1} parent=51 // pred_check_branch
                %294 = sbr.rel target = $region78
              $region77: #{expand_rf_conv.1} parent=51 // pred_region
                _
              $region78: #{expand_rf_conv.1} parent=51 // pred_fallthru
                _
            $region52: #{expand_rf_conv.1} parent=47 // pred_fallthru
              _
            // Predicated region
            $region53: #{expand_rf_conv.1} parent=47 // pred_check
              _
            $region54: #{expand_rf_conv.1} parent=47 // pred_check_branch
              %261 = sbr.rel target = $region56
            $region55: #{expand_rf_conv.1} parent=47 // pred_region
              loop: start=0, step=1, limit=1
              $region57: #{expand_rf_conv.1} parent=55 // loop_pre_header
                _
              $region58: #{expand_rf_conv.1} parent=55 // loop_header
                %s264 = sphi 0, %s268
                %p265 = scmp.ge.s32.totalorder %s264, 1
                %s269 = sphi %s255, %s255
                %s270 = sphi %s250, %s250
              $region59: #{expand_rf_conv.1} parent=55 // loop_header_branch
                %267 = sbr.rel (%p265) target = $region63
              $region60: #{expand_rf_conv.1} parent=55 // loop_body
                %v271 = vld [vmem:[%s269] sm:$0xff]
                %272 = vst [vmem:[%s270] sm:$0xff] %v271
                %v273 = vld [vmem:[%s269 + $0x10] sm:$0xff]
                %274 = vst [vmem:[%s270 + $0x8] sm:$0xff] %v273
                %v275 = vld [vmem:[%s269 + $0x20] sm:$0xff]
                %276 = vst [vmem:[%s270 + $0x10] sm:$0xff] %v275
              $region61: #{expand_rf_conv.1} parent=55 // loop_footer
                %s268 = sadd.s32 1, %s264
              $region62: #{expand_rf_conv.1} parent=55 // loop_footer_branch
                %263 = sbr.rel target = $region58
              $region63: #{expand_rf_conv.1} parent=55 // loop_exit
                _
            $region56: #{expand_rf_conv.1} parent=47 // pred_fallthru
              _
          $region48: #{expand_rf_conv.1} parent=43 // pred_fallthru
            _
          %295 = vnop
        $region44: #{expand_rf_conv.1} parent=39 // pred_fallthru
          _
      $region40: #{expand_rf_conv.1} parent=5 // pred_fallthru
        _
      %p296 = scmp.le.s32.totalorder 1, %s13
      %p297 = scmp.lt.s32.totalorder %s13, 3
      %p298 = pnand %p296, %p297
      %p299 = pneg %p298
      // Predicated region
      $region79: #{expand_rf_conv.1} parent=5 // pred_check
        _
      $region80: #{expand_rf_conv.1} parent=5 // pred_check_branch
        %301 = sbr.rel (%p298) target = $region82
      $region81: #{expand_rf_conv.1} parent=5 // pred_region
        %s302 = ssub.s32 %s13, 1
        %s303 = sand.u32 %s40, 1
        %s304 = sand.u32 %s40, 1
        %s305 = smul.addr %s304, 24
        %s306 = scalar_lea.vmem [#allocation2], %s305
        // Predicated region
        $region83: #{expand_rf_conv.1} parent=81 // pred_check
          %p307 = pneg %p53
        $region84: #{expand_rf_conv.1} parent=81 // pred_check_branch
          %309 = sbr.rel (%p307) target = $region86
        $region85: #{expand_rf_conv.1} parent=81 // pred_region
          _
        $region86: #{expand_rf_conv.1} parent=81 // pred_fallthru
          _
        %s310 = sand.u32 %s40, 1
        %s311 = sand.u32 %s40, 1
        %s312 = smul.addr %s311, 24
        %s313 = scalar_lea.vmem [#allocation2], %s312
        %p314 = pneg %p53
        %p315 = pneg %p50
        %p316 = pneg %p74
        %p317 = pneg %p71
        %p318 = pneg %p95
        %p319 = pneg %p92
        %p320 = pneg %p116
        %p321 = pneg %p113
        %p322 = pneg %p137
        %p323 = pneg %p134
        %p324 = pneg %p158
        %p325 = pneg %p155
        %p326 = pneg %p179
        %p327 = pneg %p176
        %p328 = pneg %p207
        %p329 = pneg %p204
        %s330 = sand.u32 %s194, 1
        %s331 = sand.u32 %s194, 1
        %s332 = smul.addr %s331, 24
        %s333 = scalar_lea.vmem [#allocation3], %s332
        %s334 = smul.u32 2, %s23
        %s335 = smul.u32 2, %s23
        %v336 = vld [vmem:[%s306] sm:$0xff]
        %s337 = scalar_lea.vmem %s306, 8 [#allocation2]
        %v338 = vld [vmem:[%s337] sm:$0xff]
        %s339 = scalar_lea.vmem %s306, 16 [#allocation2]
        %v340 = vld [vmem:[%s339] sm:$0xff]
        %v341 = vld [vmem:[%s1] sm:$0xf]
        %v342 = vld [vmem:[%s2] sm:$0xf]
        %344 = vset.pattern.permute.xlu0 0
        %345 = vperm.xlu0 %344, %v342
        %v346 = vpop.permute.xlu0 %345
        %v349 = vcombine.high %v336, %v336
        %vm350 = vcmask 31744
        %v352 = vsel %vm350, %v341, 0
        %vm354 = vcmask 1043456
        %v355 = vsel %vm354, %v336, 0
        %v357 = vsel %vm354, %v349, 0
        %359 = vmatprep.subr.mxu0 %v357
        %360 = vmatpush1.msra.mxu0 %v355
        %361 = vmatprep.subr.mxu0 0.0
        %362 = vmatpush1.msra.mxu0 0.0
        %363 = vmatprep.subr.mxu0 0.0
        %364 = vmatpush1.msra.mxu0 0.0
        %365 = vmatprep.subr.mxu0 0.0
        %366 = vmatpush1.msra.mxu0 0.0
        %367 = vmatprep.subr.mxu0 0.0
        %368 = vmatpush1.msra.mxu0 0.0
        %369 = vmatprep.subr.mxu0 0.0
        %370 = vmatpush1.msra.mxu0 0.0
        %371 = vmatprep.subr.mxu0 0.0
        %372 = vmatpush1.msra.mxu0 0.0
        %373 = vmatprep.subr.mxu0 0.0
        %374 = vmatpush1.msra.mxu0 0.0
        %375 = vmatprep.subr.mxu0 0.0
        %376 = vmatpush1.msra.mxu0 0.0
        %377 = vmatprep.subr.mxu0 0.0
        %378 = vmatpush1.msra.mxu0 0.0
        %379 = vmatprep.subr.mxu0 0.0
        %380 = vmatpush1.msra.mxu0 0.0
        %381 = vmatprep.subr.mxu0 0.0
        %382 = vmatpush1.msra.mxu0 0.0
        %383 = vmatprep.subr.mxu0 0.0
        %384 = vmatpush1.msra.mxu0 0.0
        %385 = vmatprep.subr.mxu0 0.0
        %386 = vmatpush1.msra.mxu0 0.0
        %387 = vmatprep.subr.mxu0 0.0
        %388 = vmatpush1.msra.mxu0 0.0
        %389 = vmatprep.subr.mxu0 0.0
        %390 = vmatpush1.msra.mxu0 0.0
        %391 = vmatprep.subr.mxu0 0.0
        %392 = vmatpush1.msra.mxu0 0.0
        %393 = vmatprep.subr.mxu0 0.0
        %394 = vmatpush1.msra.mxu0 0.0
        %395 = vmatprep.subr.mxu0 0.0
        %396 = vmatpush1.msra.mxu0 0.0
        %397 = vmatprep.subr.mxu0 0.0
        %398 = vmatpush1.msra.mxu0 0.0
        %399 = vmatprep.subr.mxu0 0.0
        %400 = vmatpush1.msra.mxu0 0.0
        %401 = vmatprep.subr.mxu0 0.0
        %402 = vmatpush1.msra.mxu0 0.0
        %403 = vmatprep.subr.mxu0 0.0
        %404 = vmatpush1.msra.mxu0 0.0
        %405 = vmatprep.subr.mxu0 0.0
        %406 = vmatpush1.msra.mxu0 0.0
        %407 = vmatprep.subr.mxu0 0.0
        %408 = vmatpush1.msra.mxu0 0.0
        %409 = vmatprep.subr.mxu0 0.0
        %410 = vmatpush1.msra.mxu0 0.0
        %411 = vmatprep.subr.mxu0 0.0
        %412 = vmatpush1.msra.mxu0 0.0
        %413 = vmatprep.subr.mxu0 0.0
        %414 = vmatpush1.msra.mxu0 0.0
        %415 = vmatprep.subr.mxu0 0.0
        %416 = vmatpush1.msra.mxu0 0.0
        %417 = vmatprep.subr.mxu0 0.0
        %418 = vmatpush1.msra.mxu0 0.0
        %419 = vmatprep.subr.mxu0 0.0
        %420 = vmatpush1.msra.mxu0 0.0
        %421 = vmatprep.subr.mxu0 0.0
        %422 = vmatpush1.msra.mxu0 0.0
        %423 = vmatprep.mubr.f32.mxu0 0.0
        %424 = vmatmul.mubr.f32.gmra.mrb[0].mxu0 %v352
        %v425 = vpop.f32.mrb[0].mxu0
        %v426 = vadd.f32 %v346, %v425
        %v427 = vpop.f32.mrb[0].mxu0
        %v428 = vadd.f32 %v346, %v427
        %429 = vdwg.mxu0
        %v430 = vld [vmem:[%s3] sm:$0xf]
        %v431 = vld [vmem:[%s4] sm:$0xf]
        %433 = vset.pattern.permute.xlu0 0
        %434 = vperm.xlu0 %433, %v431
        %v435 = vpop.permute.xlu0 %434
        %v438 = vsel %vm350, %v430, 0
        %440 = vmatprep.subr.mxu0 %v357
        %441 = vmatpush1.msra.mxu0 %v355
        %442 = vmatprep.subr.mxu0 0.0
        %443 = vmatpush1.msra.mxu0 0.0
        %444 = vmatprep.subr.mxu0 0.0
        %445 = vmatpush1.msra.mxu0 0.0
        %446 = vmatprep.subr.mxu0 0.0
        %447 = vmatpush1.msra.mxu0 0.0
        %448 = vmatprep.subr.mxu0 0.0
        %449 = vmatpush1.msra.mxu0 0.0
        %450 = vmatprep.subr.mxu0 0.0
        %451 = vmatpush1.msra.mxu0 0.0
        %452 = vmatprep.subr.mxu0 0.0
        %453 = vmatpush1.msra.mxu0 0.0
        %454 = vmatprep.subr.mxu0 0.0
        %455 = vmatpush1.msra.mxu0 0.0
        %456 = vmatprep.subr.mxu0 0.0
        %457 = vmatpush1.msra.mxu0 0.0
        %458 = vmatprep.subr.mxu0 0.0
        %459 = vmatpush1.msra.mxu0 0.0
        %460 = vmatprep.subr.mxu0 0.0
        %461 = vmatpush1.msra.mxu0 0.0
        %462 = vmatprep.subr.mxu0 0.0
        %463 = vmatpush1.msra.mxu0 0.0
        %464 = vmatprep.subr.mxu0 0.0
        %465 = vmatpush1.msra.mxu0 0.0
        %466 = vmatprep.subr.mxu0 0.0
        %467 = vmatpush1.msra.mxu0 0.0
        %468 = vmatprep.subr.mxu0 0.0
        %469 = vmatpush1.msra.mxu0 0.0
        %470 = vmatprep.subr.mxu0 0.0
        %471 = vmatpush1.msra.mxu0 0.0
        %472 = vmatprep.subr.mxu0 0.0
        %473 = vmatpush1.msra.mxu0 0.0
        %474 = vmatprep.subr.mxu0 0.0
        %475 = vmatpush1.msra.mxu0 0.0
        %476 = vmatprep.subr.mxu0 0.0
        %477 = vmatpush1.msra.mxu0 0.0
        %478 = vmatprep.subr.mxu0 0.0
        %479 = vmatpush1.msra.mxu0 0.0
        %480 = vmatprep.subr.mxu0 0.0
        %481 = vmatpush1.msra.mxu0 0.0
        %482 = vmatprep.subr.mxu0 0.0
        %483 = vmatpush1.msra.mxu0 0.0
        %484 = vmatprep.subr.mxu0 0.0
        %485 = vmatpush1.msra.mxu0 0.0
        %486 = vmatprep.subr.mxu0 0.0
        %487 = vmatpush1.msra.mxu0 0.0
        %488 = vmatprep.subr.mxu0 0.0
        %489 = vmatpush1.msra.mxu0 0.0
        %490 = vmatprep.subr.mxu0 0.0
        %491 = vmatpush1.msra.mxu0 0.0
        %492 = vmatprep.subr.mxu0 0.0
        %493 = vmatpush1.msra.mxu0 0.0
        %494 = vmatprep.subr.mxu0 0.0
        %495 = vmatpush1.msra.mxu0 0.0
        %496 = vmatprep.subr.mxu0 0.0
        %497 = vmatpush1.msra.mxu0 0.0
        %498 = vmatprep.subr.mxu0 0.0
        %499 = vmatpush1.msra.mxu0 0.0
        %500 = vmatprep.subr.mxu0 0.0
        %501 = vmatpush1.msra.mxu0 0.0
        %502 = vmatprep.subr.mxu0 0.0
        %503 = vmatpush1.msra.mxu0 0.0
        %504 = vmatprep.mubr.f32.mxu0 0.0
        %505 = vmatmul.mubr.f32.gmra.mrb[0].mxu0 %v438
        %v506 = vpop.f32.mrb[0].mxu0
        %v507 = vadd.f32 %v435, %v506
        %v508 = vpop.f32.mrb[0].mxu0
        %v509 = vadd.f32 %v435, %v508
        %510 = vdwg.mxu0
        %v511 = vld [vmem:[%s5] sm:$0xf]
        %v512 = vld [vmem:[%s6] sm:$0xf]
        %514 = vset.pattern.permute.xlu0 0
        %515 = vperm.xlu0 %514, %v512
        %v516 = vpop.permute.xlu0 %515
        %v519 = vcombine.high %v338, %v338
        %v521 = vsel %vm350, %v511, 0
        %v523 = vsel %vm354, %v338, 0
        %v525 = vsel %vm354, %v519, 0
        %527 = vmatprep.subr.mxu0 %v525
        %528 = vmatpush1.msra.mxu0 %v523
        %529 = vmatprep.subr.mxu0 0.0
        %530 = vmatpush1.msra.mxu0 0.0
        %531 = vmatprep.subr.mxu0 0.0
        %532 = vmatpush1.msra.mxu0 0.0
        %533 = vmatprep.subr.mxu0 0.0
        %534 = vmatpush1.msra.mxu0 0.0
        %535 = vmatprep.subr.mxu0 0.0
        %536 = vmatpush1.msra.mxu0 0.0
        %537 = vmatprep.subr.mxu0 0.0
        %538 = vmatpush1.msra.mxu0 0.0
        %539 = vmatprep.subr.mxu0 0.0
        %540 = vmatpush1.msra.mxu0 0.0
        %541 = vmatprep.subr.mxu0 0.0
        %542 = vmatpush1.msra.mxu0 0.0
        %543 = vmatprep.subr.mxu0 0.0
        %544 = vmatpush1.msra.mxu0 0.0
        %545 = vmatprep.subr.mxu0 0.0
        %546 = vmatpush1.msra.mxu0 0.0
        %547 = vmatprep.subr.mxu0 0.0
        %548 = vmatpush1.msra.mxu0 0.0
        %549 = vmatprep.subr.mxu0 0.0
        %550 = vmatpush1.msra.mxu0 0.0
        %551 = vmatprep.subr.mxu0 0.0
        %552 = vmatpush1.msra.mxu0 0.0
        %553 = vmatprep.subr.mxu0 0.0
        %554 = vmatpush1.msra.mxu0 0.0
        %555 = vmatprep.subr.mxu0 0.0
        %556 = vmatpush1.msra.mxu0 0.0
        %557 = vmatprep.subr.mxu0 0.0
        %558 = vmatpush1.msra.mxu0 0.0
        %559 = vmatprep.subr.mxu0 0.0
        %560 = vmatpush1.msra.mxu0 0.0
        %561 = vmatprep.subr.mxu0 0.0
        %562 = vmatpush1.msra.mxu0 0.0
        %563 = vmatprep.subr.mxu0 0.0
        %564 = vmatpush1.msra.mxu0 0.0
        %565 = vmatprep.subr.mxu0 0.0
        %566 = vmatpush1.msra.mxu0 0.0
        %567 = vmatprep.subr.mxu0 0.0
        %568 = vmatpush1.msra.mxu0 0.0
        %569 = vmatprep.subr.mxu0 0.0
        %570 = vmatpush1.msra.mxu0 0.0
        %571 = vmatprep.subr.mxu0 0.0
        %572 = vmatpush1.msra.mxu0 0.0
        %573 = vmatprep.subr.mxu0 0.0
        %574 = vmatpush1.msra.mxu0 0.0
        %575 = vmatprep.subr.mxu0 0.0
        %576 = vmatpush1.msra.mxu0 0.0
        %577 = vmatprep.subr.mxu0 0.0
        %578 = vmatpush1.msra.mxu0 0.0
        %579 = vmatprep.subr.mxu0 0.0
        %580 = vmatpush1.msra.mxu0 0.0
        %581 = vmatprep.subr.mxu0 0.0
        %582 = vmatpush1.msra.mxu0 0.0
        %583 = vmatprep.subr.mxu0 0.0
        %584 = vmatpush1.msra.mxu0 0.0
        %585 = vmatprep.subr.mxu0 0.0
        %586 = vmatpush1.msra.mxu0 0.0
        %587 = vmatprep.subr.mxu0 0.0
        %588 = vmatpush1.msra.mxu0 0.0
        %589 = vmatprep.subr.mxu0 0.0
        %590 = vmatpush1.msra.mxu0 0.0
        %591 = vmatprep.mubr.f32.mxu0 0.0
        %592 = vmatmul.mubr.f32.gmra.mrb[0].mxu0 %v521
        %v593 = vpop.f32.mrb[0].mxu0
        %v594 = vadd.f32 %v516, %v593
        %v595 = vpop.f32.mrb[0].mxu0
        %v596 = vadd.f32 %v516, %v595
        %597 = vdwg.mxu0
        %598 = vst [vmem:[%s333] sm:$0xff] %v336
        %v601 = vcombine.low %v426, %v428
        %v603 = vadd.f32 %v338, %v601
        %s604 = scalar_lea.vmem %s333, 8 [#allocation3]
        %605 = vst [vmem:[%s604] sm:$0xff] %v603
        %v608 = vcombine.low %v594, %v596
        %v610 = vadd.f32 %v340, %v608
        %v613 = vcombine.low %v507, %v509
        %v615 = vadd.f32 %v610, %v613
        %s616 = scalar_lea.vmem %s333, 16 [#allocation3]
        %617 = vst [vmem:[%s616] sm:$0xff] %v615
        %s618 = sand.u32 %s194, 1
        %s619 = sand.u32 %s194, 1
        %s620 = smul.addr %s619, 24
        %s621 = scalar_lea.vmem [#allocation3], %s620
        // Predicated region
        $region87: #{expand_rf_conv.1} parent=81 // pred_check
          %p622 = pneg %p204
        $region88: #{expand_rf_conv.1} parent=81 // pred_check_branch
          %624 = sbr.rel (%p622) target = $region90
        $region89: #{expand_rf_conv.1} parent=81 // pred_region
          %s625 = smul.u32 2, %s23
          %s626 = smul.addr %s22, 2
          %s627 = sadd.s32 %s625, %s626
          %s628 = smul.addr %s627, 4
          %s629 = scalar_lea.vmem %s7, %s628
          // Predicated region
          $region91: #{expand_rf_conv.1} parent=89 // pred_check
            _
          $region92: #{expand_rf_conv.1} parent=89 // pred_check_branch
            %631 = sbr.rel (0) target = $region94
          $region93: #{expand_rf_conv.1} parent=89 // pred_region
            // Predicated region
            $region95: #{expand_rf_conv.1} parent=93 // pred_check
              _
            $region96: #{expand_rf_conv.1} parent=93 // pred_check_branch
              %633 = sbr.rel (0) target = $region98
            $region97: #{expand_rf_conv.1} parent=93 // pred_region
              // Predicated region
              $region110: #{expand_rf_conv.1} parent=97 // pred_check
                _
              $region111: #{expand_rf_conv.1} parent=97 // pred_check_branch
                %652 = sbr.rel (0) target = $region113
              $region112: #{expand_rf_conv.1} parent=97 // pred_region
                loop: start=0, step=1, limit=1
                $region114: #{expand_rf_conv.1} parent=112 // loop_pre_header
                  _
                $region115: #{expand_rf_conv.1} parent=112 // loop_header
                  %s654 = sphi 0, %s658
                  %p655 = scmp.ge.s32.totalorder %s654, 1
                  %s659 = sphi %s621, %s621
                  %s660 = sphi %s629, %s629
                $region116: #{expand_rf_conv.1} parent=112 // loop_header_branch
                  %657 = sbr.rel (%p655) target = $region120
                $region117: #{expand_rf_conv.1} parent=112 // loop_body
                  %v661 = vld [vmem:[%s659] sm:$0xff]
                  %662 = vst [vmem:[%s660] sm:$0xff] %v661
                  %v663 = vld [vmem:[%s659 + $0x8] sm:$0xff]
                  %664 = vst [vmem:[%s660 + $0x10] sm:$0xff] %v663
                  %v665 = vld [vmem:[%s659 + $0x10] sm:$0xff]
                  %666 = vst [vmem:[%s660 + $0x20] sm:$0xff] %v665
                $region118: #{expand_rf_conv.1} parent=112 // loop_footer
                  %s658 = sadd.s32 1, %s654
                $region119: #{expand_rf_conv.1} parent=112 // loop_footer_branch
                  %653 = sbr.rel target = $region115
                $region120: #{expand_rf_conv.1} parent=112 // loop_exit
                  _
              $region113: #{expand_rf_conv.1} parent=97 // pred_fallthru
                _
              // Predicated region
              $region121: #{expand_rf_conv.1} parent=97 // pred_check
                _
              $region122: #{expand_rf_conv.1} parent=97 // pred_check_branch
                %668 = sbr.rel target = $region124
              $region123: #{expand_rf_conv.1} parent=97 // pred_region
                _
              $region124: #{expand_rf_conv.1} parent=97 // pred_fallthru
                _
            $region98: #{expand_rf_conv.1} parent=93 // pred_fallthru
              _
            // Predicated region
            $region99: #{expand_rf_conv.1} parent=93 // pred_check
              _
            $region100: #{expand_rf_conv.1} parent=93 // pred_check_branch
              %635 = sbr.rel target = $region102
            $region101: #{expand_rf_conv.1} parent=93 // pred_region
              loop: start=0, step=1, limit=1
              $region103: #{expand_rf_conv.1} parent=101 // loop_pre_header
                _
              $region104: #{expand_rf_conv.1} parent=101 // loop_header
                %s638 = sphi 0, %s642
                %p639 = scmp.ge.s32.totalorder %s638, 1
                %s643 = sphi %s621, %s621
                %s644 = sphi %s629, %s629
              $region105: #{expand_rf_conv.1} parent=101 // loop_header_branch
                %641 = sbr.rel (%p639) target = $region109
              $region106: #{expand_rf_conv.1} parent=101 // loop_body
                %v645 = vld [vmem:[%s643] sm:$0xff]
                %646 = vst [vmem:[%s644] sm:$0xff] %v645
                %v647 = vld [vmem:[%s643 + $0x8] sm:$0xff]
                %648 = vst [vmem:[%s644 + $0x10] sm:$0xff] %v647
                %v649 = vld [vmem:[%s643 + $0x10] sm:$0xff]
                %650 = vst [vmem:[%s644 + $0x20] sm:$0xff] %v649
              $region107: #{expand_rf_conv.1} parent=101 // loop_footer
                %s642 = sadd.s32 1, %s638
              $region108: #{expand_rf_conv.1} parent=101 // loop_footer_branch
                %637 = sbr.rel target = $region104
              $region109: #{expand_rf_conv.1} parent=101 // loop_exit
                _
            $region102: #{expand_rf_conv.1} parent=93 // pred_fallthru
              _
          $region94: #{expand_rf_conv.1} parent=89 // pred_fallthru
            _
          %669 = vnop
        $region90: #{expand_rf_conv.1} parent=81 // pred_fallthru
          _
      $region82: #{expand_rf_conv.1} parent=5 // pred_fallthru
        _
      %p670 = scmp.le.s32.totalorder 2, %s13
      // Predicated region
      $region125: #{expand_rf_conv.1} parent=5 // pred_check
        %p671 = pneg %p670
      $region126: #{expand_rf_conv.1} parent=5 // pred_check_branch
        %673 = sbr.rel (%p671) target = $region128
      $region127: #{expand_rf_conv.1} parent=5 // pred_region
        %s674 = ssub.s32 %s13, 2
        // Predicated region
        $region129: #{expand_rf_conv.1} parent=127 // pred_check
          %p675 = pneg %p210
        $region130: #{expand_rf_conv.1} parent=127 // pred_check_branch
          %677 = sbr.rel (%p675) target = $region132
        $region131: #{expand_rf_conv.1} parent=127 // pred_region
          %s678 = sand.u32 %s195, 1
          %s679 = sand.u32 %s195, 1
          %s680 = smul.addr %s679, 24
          %s681 = scalar_lea.vmem [#allocation3], %s680
        $region132: #{expand_rf_conv.1} parent=127 // pred_fallthru
          _
      $region128: #{expand_rf_conv.1} parent=5 // pred_fallthru
        _
    $region6: #{expand_rf_conv.1} parent=1 // loop_footer
      %s17 = sadd.s32 1, %s13
    $region7: #{expand_rf_conv.1} parent=1 // loop_footer_branch
      %12 = sbr.rel target = $region3
    $region8: #{expand_rf_conv.1} parent=1 // loop_exit
      _

</llo_original>
